<compile_context>
chip_gen: v7x
topology: tpu7x:2x2x1
jax: 0.10.0
libtpu: 0.0.40
codegen_flags: <defaults>
</compile_context>

<pallas_src>
import math

import jax
import jax.numpy as jnp
from jax import lax
from jax.experimental import pallas as pl
from jax.experimental.pallas import tpu as pltpu


def _lcm(a: int, b: int) -> int:
    return a * b // math.gcd(a, b)


def _round_up(a: int, b: int) -> int:
    return (a + b - 1) // b * b


def _choose_block_rows(total_rows: int, f_rep: int, n: int,
                       out_itemsize: int, budget_bytes: int = 20 << 20) -> int:
    """Flattened rows processed per grid step, from a corrected VMEM budget."""
    # Per-buffer VMEM bytes per flattened row:
    #   output tile : 2n * itemsize
    #   x tile      : lane-padded (F_rep, 1) -> full (8,128) tiles => ~512 B/row
    per_row = 2 * n * out_itemsize + 512
    rows_budget = (budget_bytes // 2) // per_row          # /2 : double buffering
    rows_budget = max(f_rep, rows_budget // f_rep * f_rep)
    # Keep at least 2 grid steps when there is enough work (v7x has 2 TCs).
    half_rows = _round_up(max((total_rows + 1) // 2, f_rep), f_rep)
    return max(f_rep, min(rows_budget, half_rows))


def _periodic_kernel(x_ref, coeff_ref, out_ref):
    # x_ref:     (RB, F_rep, 1)   f32 — one scalar per output row
    # coeff_ref: (1,  F_rep, 2n)  f32 — 2*pi * [coeff | coeff], VMEM-resident
    # out_ref:   (RB, F_rep, 2n)  [cos | sin] written as a single cos stream
    two_n = out_ref.shape[-1]
    half = two_n // 2
    lane = lax.broadcasted_iota(jnp.int32, (1, 1, two_n), 2)
    phase = jnp.where(lane >= half, -0.5 * math.pi, 0.0)   # 0 -> cos, -pi/2 -> sin
    y = x_ref[...] * coeff_ref[...] + phase                # (RB, F_rep, 2n), f32
    out_ref[...] = jnp.cos(y).astype(out_ref.dtype)


def periodic_tokenizer(x: jax.Array,
                       coefficients: jax.Array,
                       *,
                       out_dtype=None,
                       block_rows: int | None = None) -> jax.Array:
    """x: [B, F], coefficients: [F, n] -> [B, F, 2n]."""
    B, F = x.shape
    F2, n = coefficients.shape
    assert F == F2, "coefficients first dim must match n_features"
    out_dtype = jnp.dtype(x.dtype if out_dtype is None else out_dtype)
    out_itemsize = out_dtype.itemsize

    # Sublane-aligned feature repeat (16 for 2-byte outputs -> clean bf16 tiles).
    sublane = 16 if out_itemsize == 2 else 8
    f_rep = _lcm(F, sublane)
    total_rows = B * F

    if block_rows is None:
        R = _choose_block_rows(total_rows, f_rep, n, out_itemsize)
    else:
        R = max(f_rep, _round_up(block_rows, f_rep))
    padded_rows = _round_up(total_rows, R)
    grid = padded_rows // R
    rb = R // f_rep
    g_total = padded_rows // f_rep

    # Angle math stays f32 regardless of x / output dtype (cos/sin accuracy).
    x_flat = x.astype(jnp.float32).reshape(total_rows)
    if padded_rows != total_rows:
        x_flat = jnp.pad(x_flat, (0, padded_rows - total_rows))
    x3 = x_flat.reshape(g_total, f_rep, 1)

    # 2*pi pre-folded; cos/sin halves concatenated; tiled only to f_rep rows.
    coeff_f32 = coefficients.astype(jnp.float32)
    coeff_ext = (2.0 * math.pi) * jnp.concatenate([coeff_f32, coeff_f32], axis=-1)
    coeff_blk = jnp.tile(coeff_ext, (f_rep // F, 1)).reshape(1, f_rep, 2 * n)

    # Corrected VMEM estimate: (out tile + lane-padded x tile + coeff), double-buffered.
    est = 2 * (R * 2 * n * out_itemsize + R * 512 + f_rep * 2 * n * 4)
    vmem_limit = int(max(est + (2 << 20), 16 << 20))

    out3 = pl.pallas_call(
        _periodic_kernel,
        out_shape=jax.ShapeDtypeStruct((g_total, f_rep, 2 * n), out_dtype),
        grid_spec=pltpu.PrefetchScalarGridSpec(
            num_scalar_prefetch=0,
            grid=(grid,),
            in_specs=[
                pl.BlockSpec((rb, f_rep, 1), lambda i: (i, 0, 0)),       # x rows
                pl.BlockSpec((1, f_rep, 2 * n), lambda i: (0, 0, 0)),    # resident coeffs
            ],
            out_specs=pl.BlockSpec((rb, f_rep, 2 * n), lambda i: (i, 0, 0)),
        ),
        compiler_params=pltpu.CompilerParams(
            dimension_semantics=("parallel",),       # megacore-shardable on v7x
            vmem_limit_bytes=vmem_limit,
        ),
    )(x3, coeff_blk)

    out_flat = out3.reshape(padded_rows, 2 * n)
    if padded_rows != total_rows:
        out_flat = out_flat[:total_rows]
    return out_flat.reshape(B, F, 2 * n)


def make_coefficients(n_features: int, n: int, sigma: float,
                      initialization: str = "log-linear") -> jax.Array:
    """Deterministic parameter init mirroring PeriodicTokenizerModule.__init__."""
    if initialization == "log-linear":
        coeff_row = sigma ** (jnp.arange(n, dtype=jnp.float32) / n)   # (n,)
        coefficients = jnp.tile(coeff_row[None, :], (n_features, 1))  # (F, n)
    else:  # 'normal'
        key = jax.random.PRNGKey(42)
        coefficients = sigma * jax.random.normal(key, (n_features, n),
                                                 dtype=jnp.float32)
    return coefficients


def reference(x: jax.Array, coefficients: jax.Array) -> jax.Array:
    """Pure-JAX reference for correctness checking."""
    y = 2.0 * math.pi * coefficients[None] * x[..., None]
    return jnp.concatenate([jnp.cos(y), jnp.sin(y)], axis=-1)


if __name__ == "__main__":
    sigma = 0.05

    # Case 1: small shapes matching the module's forward (single grid step).
    batch, n_features, n = 2, 4, 64          # output last dim = 2*n = 128
    key = jax.random.PRNGKey(0)
    x = jax.random.normal(key, (batch, n_features), dtype=jnp.float32)
    coefficients = make_coefficients(n_features, n, sigma, "log-linear")

    out = jax.block_until_ready(periodic_tokenizer(x, coefficients))
    ref = reference(x, coefficients)
    assert out.shape == (batch, n_features, 2 * n), out.shape
    assert jnp.allclose(out, ref, atol=2e-5, rtol=1e-5), "mismatch vs reference"

    # Case 2: multi-step grid + tail padding, default block sizing.
    batch2 = 33
    x2 = jax.random.normal(jax.random.PRNGKey(1), (batch2, n_features),
                           dtype=jnp.float32)
    ref2 = reference(x2, coefficients)
    out2 = jax.block_until_ready(periodic_tokenizer(x2, coefficients))
    assert out2.shape == (batch2, n_features, 2 * n), out2.shape
    assert jnp.allclose(out2, ref2, atol=2e-5, rtol=1e-5), "mismatch (default tiling)"

    # Case 3: explicit block_rows override (3 grid steps, padded tail).
    out3 = jax.block_until_ready(
        periodic_tokenizer(x2, coefficients, block_rows=48))
    assert jnp.allclose(out3, ref2, atol=2e-5, rtol=1e-5), "mismatch (block_rows=48)"

    print("KERNEL_OK")
</pallas_src>

<mosaic_0001>
module attributes {stable_mosaic.version = 11 : i64} {
  func.func @_periodic_kernel(%arg0: i32, %arg1: memref<1x8x1xf32, #tpu.memory_space<vmem>>, %arg2: memref<1x8x128xf32, #tpu.memory_space<vmem>>, %arg3: memref<1x8x128xf32, #tpu.memory_space<vmem>>) attributes {dimension_semantics = [#tpu.dimension_semantics<parallel>], iteration_bounds = array<i64: 1>, scalar_prefetch = 0 : i64, scratch_operands = 0 : i64, tpu.core_type = #tpu.core_type<tc>, window_params = [{transform_indices = @transform_0, window_bounds = array<i64: 1, 8, 1>}, {pipeline_mode = #tpu.pipeline_mode<synchronous>, transform_indices = @transform_1, window_bounds = array<i64: 1, 8, 128>}, {transform_indices = @transform_2, window_bounds = array<i64: 1, 8, 128>}]} {
    %0 = tpu.iota {dimensions = array<i32: 2>} : vector<1x1x128xi32>
    %c64_i32 = arith.constant 64 : i32
    %1 = vector.broadcast %c64_i32 : i32 to vector<1x1x128xi32>
    %2 = arith.cmpi sge, %0, %1 : vector<1x1x128xi32>
    %cst = arith.constant -1.57079637 : f32
    %cst_0 = arith.constant 0.000000e+00 : f32
    %3 = vector.broadcast %cst : f32 to vector<1x1x128xf32>
    %4 = vector.broadcast %cst_0 : f32 to vector<1x1x128xf32>
    %5 = arith.select %2, %3, %4 : vector<1x1x128xi1>, vector<1x1x128xf32>
    %c0 = arith.constant 0 : index
    %c0_1 = arith.constant 0 : index
    %c0_2 = arith.constant 0 : index
    %6 = vector.load %arg1[%c0, %c0_1, %c0_2] : memref<1x8x1xf32, #tpu.memory_space<vmem>>, vector<1x8x1xf32>
    %c0_3 = arith.constant 0 : index
    %c0_4 = arith.constant 0 : index
    %c0_5 = arith.constant 0 : index
    %7 = vector.load %arg2[%c0_3, %c0_4, %c0_5] : memref<1x8x128xf32, #tpu.memory_space<vmem>>, vector<1x8x128xf32>
    %8 = vector.broadcast %6 : vector<1x8x1xf32> to vector<1x8x128xf32>
    %9 = arith.mulf %8, %7 : vector<1x8x128xf32>
    %10 = vector.broadcast %5 : vector<1x1x128xf32> to vector<1x8x128xf32>
    %11 = arith.addf %9, %10 : vector<1x8x128xf32>
    %12 = math.cos %11 : vector<1x8x128xf32>
    %c0_6 = arith.constant 0 : index
    %c0_7 = arith.constant 0 : index
    %c0_8 = arith.constant 0 : index
    %13 = vector.load %arg3[%c0_6, %c0_7, %c0_8] : memref<1x8x128xf32, #tpu.memory_space<vmem>>, vector<1x8x128xf32>
    tpu.vector_store %arg3[%c0_6, %c0_7, %c0_8], %12 {strides = array<i32>} : memref<1x8x128xf32, #tpu.memory_space<vmem>>, vector<1x8x128xf32>,
    return
  }
  func.func @transform_0(%arg0: i32) -> (i32, i32, i32) {
    %c0_i32 = arith.constant 0 : i32
    %c0_i32_0 = arith.constant 0 : i32
    %c0_i32_1 = arith.constant 0 : i32
    return %arg0, %c0_i32, %c0_i32_0 : i32, i32, i32
  }
  func.func @transform_1(%arg0: i32) -> (i32, i32, i32) {
    %c0_i32 = arith.constant 0 : i32
    %c0_i32_0 = arith.constant 0 : i32
    %c0_i32_1 = arith.constant 0 : i32
    %c0_i32_2 = arith.constant 0 : i32
    return %c0_i32, %c0_i32_0, %c0_i32_1 : i32, i32, i32
  }
  func.func @transform_2(%arg0: i32) -> (i32, i32, i32) {
    %c0_i32 = arith.constant 0 : i32
    %c0_i32_0 = arith.constant 0 : i32
    %c0_i32_1 = arith.constant 0 : i32
    return %arg0, %c0_i32, %c0_i32_0 : i32, i32, i32
  }
}

</mosaic_0001>

<llo_original>
// kernel: tpu_custom_call.1
$region0: #{tpu_custom_call.1}
  #allocation0 [shape = 'u32[]', space=smem, size = 0x4, offset = 0x4, fixed_abs, tag = 'smem constant byte address 0x4 - core index']
  #allocation1 [shape = 'u32[144,128]{1,0:T(1,128)}', space=vmem, size = 0x12000, scoped, tag = 'internal scratch']
  %s0 = inlined_call_operand.vmem [shape: f32[1,8,1], index: 0, kind: input, shape index: {}]
  %s1 = inlined_call_operand.vmem [shape: f32[1,8,128], index: 1, kind: input, shape index: {}]
  %s2 = inlined_call_operand.hbm [shape: f32[1,8,128], index: 2, kind: output, shape index: {}]
  %s3 = sld [smem:[#allocation0]]
  $region18: #{tpu_custom_call.1} parent=0
    _
  %s5 = ssub.s32 1, %s3
  %s6 = scalar_select 0, %s5, %s3
  $region1: #{tpu_custom_call.1} parent=0
    #allocation2 [shape = 'u8[4096]{0}', space=vmem, size = 0x1000, scoped, tag = 'output window, operand 0, single buffered']
    #allocation3 [shape = 's32[1]{0}', space=sflag, size = 0x4, scoped, tag = 'scoped memory for tpu_custom_call.1']
    %7 = vsyncpa [#allocation3], 0
    // Predicated region
    $region2: #{tpu_custom_call.1} parent=1 // pred_check
      _
    $region3: #{tpu_custom_call.1} parent=1 // pred_check_branch
      %9 = sbr.rel (0) target = $region5
    $region4: #{tpu_custom_call.1} parent=1 // pred_region
      _
    $region5: #{tpu_custom_call.1} parent=1 // pred_fallthru
      _
    // Predicated region
    $region6: #{tpu_custom_call.1} parent=1 // pred_check
      _
    $region7: #{tpu_custom_call.1} parent=1 // pred_check_branch
      %11 = sbr.rel (0) target = $region9
    $region8: #{tpu_custom_call.1} parent=1 // pred_region
      _
    $region9: #{tpu_custom_call.1} parent=1 // pred_fallthru
      _
    %v12 = vlaneseq
    %v13 = vand.u32 %v12, 127
    %vm14 = vcmp.ge.s32.totalorder %v13, 64
    %v15 = vsel %vm14, -1.5707964, 0.0
    %v16 = vld [vmem:[%s0] sm:$0xff]
    %v17 = vld [vmem:[%s1] sm:$0xff]
    %19 = vset.pattern.permute.xlu0 0
    %20 = vperm.xlu0 %19, %v16
    %v21 = vpop.permute.xlu0 %20
    %v23 = vmul.f32 %v21, %v17
    %v24 = vadd.f32 %v23, %v15
    %v25 = vand.u32 2147483647, %v24
    %vm26 = vcmp.le.f32.partialorder %v25, 0.7853982
    %vm27 = vcmp.lt.s32.totalorder %v24, 0
    %v28 = vand.u32 %v24, 2139095040
    %v29 = vshrl.u32 %v28, 23
    %v30 = vsub.s32 %v29, 127
    %v31 = vand.u32 2147483647, %v24
    %v32 = vand.u32 %v31, 8388607
    %v33 = vor.u32 %v32, 8388608
    %v34 = vsub.s32 0, %v33
    %v35 = vadd.s32 %v30, 1
    %vm36 = vcmp.gt.s32.totalorder %v35, 0
    %v37 = vsel %vm36, %v35, 0
    %v38 = vshrl.u32 %v37, 5
    %v39 = vand.u32 %v37, 31
    %v40 = vsub.s32 32, %v39
    %v41 = vshrl.u32 683565275, %v40
    %v42 = vshll.u32 683565275, %v39
    %v43 = vshrl.u32 2475754826, %v40
    %v44 = vor.u32 %v42, %v43
    %v45 = vshll.u32 2475754826, %v39
    %v46 = vshrl.u32 2131351028, %v40
    %v47 = vor.u32 %v45, %v46
    %v48 = vshll.u32 2131351028, %v39
    %v49 = vshrl.u32 2102212464, %v40
    %v50 = vor.u32 %v48, %v49
    %v51 = vshll.u32 2102212464, %v39
    %v52 = vshrl.u32 920167782, %v40
    %v53 = vor.u32 %v51, %v52
    %v54 = vshll.u32 920167782, %v39
    %v55 = vshrl.u32 1326507024, %v40
    %v56 = vor.u32 %v54, %v55
    %vm57 = vcmp.lt.s32.totalorder %v38, 1
    %vm58 = vcmp.lt.s32.totalorder %v38, 2
    %vm59 = vcmp.lt.s32.totalorder %v38, 3
    %vm60 = vcmp.lt.s32.totalorder %v38, 4
    %v61 = vsel %vm57, %v41, %v44
    %v62 = vsel %vm60, %v50, 2102212464
    %v63 = vsel %vm59, %v47, %v62
    %v64 = vsel %vm58, %v61, %v63
    %v65 = vsel %vm57, %v44, %v47
    %v66 = vsel %vm60, %v53, 920167782
    %v67 = vsel %vm59, %v50, %v66
    %v68 = vsel %vm58, %v65, %v67
    %v69 = vsel %vm57, %v47, %v50
    %v70 = vsel %vm60, %v56, 1326507024
    %v71 = vsel %vm59, %v53, %v70
    %v72 = vsel %vm58, %v69, %v71
    %v73 = vshll.u32 %v33, 8
    %v74 = vmul.u32.u64.compose %v73, %v72
    %v75 = vextract.low.u32 %v74
    %v76 = vextract.high.u32 %v74
    %v77 = vmul.u32.u64.compose %v73, %v68
    %v78 = vextract.low.u32 %v77
    %v79 = vextract.high.u32 %v77
    %v80 = vmul.u32 %v73, %v64
    %v81 = vadd.s32 %v76, %v78
    %vm82 = vc.u32 %v76, %v78
    %v83 = vadd.s32 %v79, 1
    %v84 = vsel %vm82, %v83, %v79
    %v85 = vadd.s32 %v80, %v84
    %v86 = vadd.s32 %v85, 536870912
    %v87 = vshrl.u32 %v86, 30
    %v88 = vshll.u32 %v87, 30
    %v89 = vsub.s32 %v85, %v88
    %vm90 = vcmp.lt.s32.totalorder %v89, 0
    %v91 = vsub.s32 0, %v89
    %v92 = vsel %vm90, %v91, %v89
    %v93 = vclz %v92
    %v94 = vsub.s32 %v93, 2
    %vm95 = vcmp.gt.s32.totalorder 0, %v94
    %v96 = vsel %vm95, 0, %v94
    %v97 = vsub.s32 32, %v96
    %v98 = vshll.u32 %v89, %v96
    %v99 = vshrl.u32 %v81, %v97
    %v100 = vor.u32 %v98, %v99
    %v101 = vsub.s32 4294967266, %v96
    %v102 = vadd.s32 %v101, 127
    %v103 = vshll.u32 %v102, 23
    %v104 = vor.u32 4788187, %v103
    %v105 = vand.u32 2147483647, %v104
    %v107 = vcvt.s32.f32 %v100
    %v108 = vmul.f32 %v107, %v105
    %v109 = vxor.u32 %v108, 2147483648
    %v110 = vsel %vm27, %v109, %v108
    %v111 = vsub.s32 4, %v87
    %v112 = vsel %vm27, %v111, %v87
    %v113 = vsel %vm26, %v24, %v110
    %v114 = vsel %vm26, 0, %v112
    %v115 = vcosq.f32.pop %v113
    %v116 = vsinq.f32.pop %v113
    %vm117 = vweird.f32 %v24
    %v118 = vand.u32 %v114, 3
    %vm119 = vcmp.lt.s32.totalorder %v118, 2
    %vm120 = vcmp.eq.s32.totalorder %v118, 0
    %v121 = vxor.u32 %v116, 2147483648
    %v122 = vsel %vm120, %v115, %v121
    %vm123 = vcmp.eq.s32.totalorder %v118, 2
    %v124 = vxor.u32 %v115, 2147483648
    %v125 = vsel %vm123, %v124, %v116
    %v126 = vsel %vm119, %v122, %v125
    %v127 = vsel %vm117, nan, %v126
    %128 = vst [vmem:[#allocation2] sm:$0xff] %v127
    // Predicated region
    $region10: #{tpu_custom_call.1} parent=1 // pred_check
      _
    $region11: #{tpu_custom_call.1} parent=1 // pred_check_branch
      %130 = sbr.rel (0) target = $region13
    $region12: #{tpu_custom_call.1} parent=1 // pred_region
      %s132 = ssub.s32 128, 128
      %133 = vsyncadd [#allocation3], %s132
      %s135 = sshll.u32 [#allocation2], 4
      %s136 = int_to_ptr.vmem [resolvable:$true] %s135
      %138 = dma.vmem_to_hbm [thread:$0]  %s136, 128, %s2, [#allocation3]
    $region13: #{tpu_custom_call.1} parent=1 // pred_fallthru
      _
    // Predicated region
    $region14: #{tpu_custom_call.1} parent=1 // pred_check
      _
    $region15: #{tpu_custom_call.1} parent=1 // pred_check_branch
      %140 = sbr.rel (0) target = $region17
    $region16: #{tpu_custom_call.1} parent=1 // pred_region
      %141 = dma.done [#allocation3], 128
    $region17: #{tpu_custom_call.1} parent=1 // pred_fallthru
      _
    %142 = vsyncpa [#allocation3], 1

</llo_original>
